<compile_context>
chip_gen: v5e
topology: v5e:2x2
jax: 0.10.0
libtpu: 0.0.40
codegen_flags: <defaults>
</compile_context>

<pallas_src>
import jax
import jax.numpy as jnp
from jax import lax
from jax.experimental import pallas as pl
from jax.experimental.pallas import tpu as pltpu

NUM_CLASSES = 6      # one-hot width of the token vocabulary
SUBLANE = 8          # per-step batch rows are padded to one sublane tile


def birnn_kernel(tok_ref, win_ref, bin_ref, whh_ref, out_ref):
    """Fused bidirectional LSTM over a short token sequence.

    tok_ref : (T*BP, 2) int32  col 0 = fwd token at step t,
                               col 1 = bwd token (time T-1-t) + NUM_CLASSES
    win_ref : (2*NUM_CLASSES, 8H) f32  fused + permuted input projection
    bin_ref : (1, 8H) f32              fused + permuted gate bias
    whh_ref : (2H, 8H) f32             block-diagonal recurrent weights
    out_ref : (B, 2H) f32              [h_fwd | h_bwd] final hidden states
    """
    B = out_ref.shape[0]
    BP = SUBLANE
    TB = tok_ref.shape[0]
    T = TB // BP
    H2 = whh_ref.shape[0]          # 2H  ([fwd | bwd] state width)
    H8 = whh_ref.shape[1]          # 8H  (permuted gate width)
    H6 = 3 * H2                    # sigmoid region width (i, f, o both dirs)

    # ---- prologue (off the serial chain): double one-hot + ONE projection --
    tok = tok_ref[...]                                               # (T*BP, 2)
    lane = lax.broadcasted_iota(jnp.int32, (TB, 2 * NUM_CLASSES), 1)
    onehot = ((lane == tok[:, 0:1]) | (lane == tok[:, 1:2])).astype(jnp.float32)
    # row t*BP+b -> [fwd gate inputs from token[t,b] | bwd gate inputs from token[T-1-t,b]]
    x_all = (jnp.dot(onehot, win_ref[...], preferred_element_type=jnp.float32)
             + bin_ref[...])                                         # (T*BP, 8H)

    whh = whh_ref[...]                                               # (2H, 8H)
    h = jnp.zeros((BP, H2), jnp.float32)                             # [h_f | h_b]
    c = jnp.zeros((BP, H2), jnp.float32)                             # [c_f | c_b]

    # ---- fused bidirectional recurrence, fully unrolled (T static, tiny) ---
    # One (BP,2H)@(2H,8H) MXU matmul per step.  (On v5e the 256-wide RHS costs
    # two 128-wide MXU passes, but the shared LHS push keeps it a net win at
    # these latency-bound shapes.)
    for t in range(T):
        x_t = x_all[t * BP:(t + 1) * BP, :]          # sublane-aligned (BP, 8H)
        gates = x_t + jnp.dot(h, whh, preferred_element_type=jnp.float32)
        sig = jax.nn.sigmoid(gates[:, 0:H6])         # 2 EUP vreg pushes
        g = jnp.tanh(gates[:, H6:H8])                # 1 EUP push
        i_g = sig[:, 0:H2]                           # [i_f | i_b]
        f_g = sig[:, H2:2 * H2]                      # [f_f | f_b]
        o_g = sig[:, 2 * H2:H6]                      # [o_f | o_b]
        c = f_g * c + i_g * g
        h = o_g * jnp.tanh(c)                        # 1 EUP push

    # final hidden state already laid out as concat([h_fwd, h_bwd], axis=1)
    out_ref[...] = h[0:B, :]


def fold_params(params):
    """One-time parameter preprocessing (exact algebraic fold + re-layout).

    * Folds the transfer Linear into the LSTM input weights.
    * Fuses fwd/bwd directions into a single block-diagonal recurrence.
    * Permutes gate columns to [i_f, i_b, f_f, f_b, o_f, o_b, g_f, g_b].
    """
    HI = jax.lax.Precision.HIGHEST
    H = params["whh_f"].shape[0]
    C = NUM_CLASSES

    wc = {"f": jnp.dot(params["wt"], params["wih_f"], precision=HI),      # (6, 4H)
          "b": jnp.dot(params["wt"], params["wih_b"], precision=HI)}
    bc = {"f": jnp.dot(params["bt"], params["wih_f"], precision=HI) + params["bf"],
          "b": jnp.dot(params["bt"], params["wih_b"], precision=HI) + params["bb"]}
    whh = {"f": params["whh_f"], "b": params["whh_b"]}                     # (H, 4H)

    def blk(mat, g):                 # PyTorch gate order: i=0, f=1, g=2, o=3
        return mat[:, g * H:(g + 1) * H]

    zc = jnp.zeros((C, H), jnp.float32)
    zh = jnp.zeros((H, H), jnp.float32)
    # permuted fused column layout: (gate, direction) per H-wide block
    perm = [(0, "f"), (0, "b"), (1, "f"), (1, "b"),
            (3, "f"), (3, "b"), (2, "f"), (2, "b")]

    win_cols, bin_cols, whh_cols = [], [], []
    for g, d in perm:
        if d == "f":
            win_cols.append(jnp.concatenate([blk(wc["f"], g), zc], axis=0))
            whh_cols.append(jnp.concatenate([blk(whh["f"], g), zh], axis=0))
            bin_cols.append(blk(bc["f"], g))
        else:
            win_cols.append(jnp.concatenate([zc, blk(wc["b"], g)], axis=0))
            whh_cols.append(jnp.concatenate([zh, blk(whh["b"], g)], axis=0))
            bin_cols.append(blk(bc["b"], g))

    return {
        "w_in": jnp.concatenate(win_cols, axis=1),   # (12, 8H)
        "b_in": jnp.concatenate(bin_cols, axis=1),   # (1, 8H)
        "w_hh": jnp.concatenate(whh_cols, axis=1),   # (2H, 8H) block-diagonal
    }


def birnn_forward(x_tokens, folded):
    """x_tokens: (B, S) integer tokens; column 0 is dropped (matches x[:, 1:]).
    Returns (B, 2*hidden_dim) float32."""
    B, S = x_tokens.shape
    T = S - 1
    BP = SUBLANE
    H2 = folded["w_hh"].shape[0]
    H8 = folded["w_hh"].shape[1]

    tok = x_tokens[:, 1:].astype(jnp.int32)                      # (B, T)
    # Pad batch rows to a full sublane tile; padding rows use token 0 and
    # produce harmless state that is never stored.
    tok_p = jnp.zeros((BP, T), jnp.int32).at[:B, :].set(tok)
    tok_fwd = tok_p.T.reshape(T * BP, 1)                         # row = t*BP + b
    tok_bwd = tok_p[:, ::-1].T.reshape(T * BP, 1) + NUM_CLASSES  # time-reversed, lane-offset
    tok_pair = jnp.concatenate([tok_fwd, tok_bwd], axis=1)       # (T*BP, 2)

    TB = T * BP
    cost = pl.CostEstimate(
        flops=int(2 * TB * 2 * NUM_CLASSES * H8 + 2 * T * BP * H2 * H8),
        transcendentals=int(T * BP * (H8 + 2 * H2)),
        bytes_accessed=int(4 * (tok_pair.size + folded["w_in"].size
                                + folded["b_in"].size + folded["w_hh"].size
                                + B * H2)),
    )

    vmem = pl.BlockSpec(memory_space=pltpu.MemorySpace.VMEM)
    # No grid: total in-kernel work is a few microseconds on one TensorCore.
    # If the real workload batches many sequences per call, add a "parallel"
    # grid axis over sequence tiles (matters on v7x's 2 TCs).
    out = pl.pallas_call(
        birnn_kernel,
        out_shape=jax.ShapeDtypeStruct((B, H2), jnp.float32),
        in_specs=[vmem] * 4,
        out_specs=vmem,
        cost_estimate=cost,
    )(tok_pair, folded["w_in"], folded["b_in"], folded["w_hh"])
    return out


def init_params(key, input_dim, hidden_dim):
    """Deterministic init mirroring PyTorch Linear / LSTM uniform init.
    Weights stored transposed: (in_features, out_features); gate order i,f,g,o."""
    ks = jax.random.split(key, 12)
    k_lin = 1.0 / jnp.sqrt(input_dim)
    k_lstm = 1.0 / jnp.sqrt(hidden_dim)

    def u(k, shape, bound):
        return jax.random.uniform(k, shape, jnp.float32, -bound, bound)

    return {
        # transfer: Linear(input_dim, hidden_dim)
        "wt": u(ks[0], (input_dim, hidden_dim), k_lin),
        "bt": u(ks[1], (1, hidden_dim), k_lin),
        # forward-direction LSTM
        "wih_f": u(ks[2], (hidden_dim, 4 * hidden_dim), k_lstm),
        "whh_f": u(ks[3], (hidden_dim, 4 * hidden_dim), k_lstm),
        "bf": (u(ks[4], (1, 4 * hidden_dim), k_lstm)
               + u(ks[5], (1, 4 * hidden_dim), k_lstm)),          # b_ih + b_hh
        # backward-direction LSTM
        "wih_b": u(ks[6], (hidden_dim, 4 * hidden_dim), k_lstm),
        "whh_b": u(ks[7], (hidden_dim, 4 * hidden_dim), k_lstm),
        "bb": (u(ks[8], (1, 4 * hidden_dim), k_lstm)
               + u(ks[9], (1, 4 * hidden_dim), k_lstm)),
    }


def birnn_reference(x_tokens, params):
    """Pure-JAX (unfused, unpermuted) reference for correctness checking."""
    HI = jax.lax.Precision.HIGHEST
    B = x_tokens.shape[0]
    H = params["whh_f"].shape[0]
    tok = x_tokens[:, 1:]
    onehot = jax.nn.one_hot(tok, NUM_CLASSES, dtype=jnp.float32)        # (B, T, 6)
    xt = jnp.dot(onehot, params["wt"], precision=HI) + params["bt"]     # (B, T, H)

    def direction(x_seq, wih, whh, bias):
        h = jnp.zeros((B, H), jnp.float32)
        c = jnp.zeros((B, H), jnp.float32)
        for t in range(x_seq.shape[1]):
            gates = (jnp.dot(x_seq[:, t], wih, precision=HI)
                     + jnp.dot(h, whh, precision=HI) + bias)            # (B, 4H)
            i = jax.nn.sigmoid(gates[:, 0:H])
            f = jax.nn.sigmoid(gates[:, H:2 * H])
            g = jnp.tanh(gates[:, 2 * H:3 * H])
            o = jax.nn.sigmoid(gates[:, 3 * H:4 * H])
            c = f * c + i * g
            h = o * jnp.tanh(c)
        return h

    h_f = direction(xt, params["wih_f"], params["whh_f"], params["bf"])
    h_b = direction(xt[:, ::-1], params["wih_b"], params["whh_b"], params["bb"])
    return jnp.concatenate([h_f, h_b], axis=1)


if __name__ == "__main__":
    key = jax.random.PRNGKey(0)
    k_x, k_p = jax.random.split(key)

    batch = 2
    seq_with_prefix = 9          # forward drops column 0 -> T = 8
    input_dim = NUM_CLASSES      # one-hot width
    hidden_dim = 32

    # integer token sequence in [0, 6)
    x = jax.random.randint(k_x, (batch, seq_with_prefix), 0, NUM_CLASSES, dtype=jnp.int32)
    params = init_params(k_p, input_dim, hidden_dim)
    folded = fold_params(params)      # one-time parameter preprocessing

    out = birnn_forward(x, folded)
    out = jax.block_until_ready(out)
    assert out.shape == (batch, 2 * hidden_dim), out.shape
    assert bool(jnp.all(jnp.isfinite(out)))

    ref = birnn_reference(x, params)
    max_err = float(jnp.max(jnp.abs(out - ref)))
    assert max_err < 5e-3, f"kernel/reference mismatch: {max_err}"
    print("KERNEL_OK")
</pallas_src>

<mosaic_0001>
module attributes {stable_mosaic.version = 11 : i64} {
  func.func @birnn_kernel(%arg0: memref<64x2xi32, #tpu.memory_space<vmem>>, %arg1: memref<12x256xf32, #tpu.memory_space<vmem>>, %arg2: memref<1x256xf32, #tpu.memory_space<vmem>>, %arg3: memref<64x256xf32, #tpu.memory_space<vmem>>, %arg4: memref<2x64xf32, #tpu.memory_space<vmem>>) attributes {dimension_semantics = [], scalar_prefetch = 0 : i64, scratch_operands = 0 : i64, tpu.core_type = #tpu.core_type<tc>} {
    %c0 = arith.constant 0 : index
    %c0_0 = arith.constant 0 : index
    %0 = vector.load %arg0[%c0, %c0_0] : memref<64x2xi32, #tpu.memory_space<vmem>>, vector<64x2xi32>
    %1 = tpu.iota {dimensions = array<i32: 1>} : vector<64x12xi32>
    %2 = vector.extract_strided_slice %0 {offsets = [0, 0], sizes = [64, 1], strides = [1, 1]} : vector<64x2xi32> to vector<64x1xi32>
    %3 = vector.broadcast %2 : vector<64x1xi32> to vector<64x12xi32>
    %4 = arith.cmpi eq, %1, %3 : vector<64x12xi32>
    %5 = vector.extract_strided_slice %0 {offsets = [0, 1], sizes = [64, 1], strides = [1, 1]} : vector<64x2xi32> to vector<64x1xi32>
    %6 = vector.broadcast %5 : vector<64x1xi32> to vector<64x12xi32>
    %7 = arith.cmpi eq, %1, %6 : vector<64x12xi32>
    %8 = arith.ori %4, %7 : vector<64x12xi1>
    %9 = arith.extui %8 : vector<64x12xi1> to vector<64x12xi32>
    %10 = arith.sitofp %9 : vector<64x12xi32> to vector<64x12xf32>
    %c0_1 = arith.constant 0 : index
    %c0_2 = arith.constant 0 : index
    %11 = vector.load %arg1[%c0_1, %c0_2] : memref<12x256xf32, #tpu.memory_space<vmem>>, vector<12x256xf32>
    %cst = arith.constant dense<0.000000e+00> : vector<64x256xf32>
    %12 = tpu.matmul %10, %11, %cst {dimension_numbers = #tpu.dot_dimension_numbers<[1], [0], [0], [1], [0, 0, 1, 1], [], []>} : vector<64x12xf32>, vector<12x256xf32>, vector<64x256xf32> -> vector<64x256xf32>
    %c0_3 = arith.constant 0 : index
    %c0_4 = arith.constant 0 : index
    %13 = vector.load %arg2[%c0_3, %c0_4] : memref<1x256xf32, #tpu.memory_space<vmem>>, vector<1x256xf32>
    %14 = vector.broadcast %13 : vector<1x256xf32> to vector<64x256xf32>
    %15 = arith.addf %12, %14 : vector<64x256xf32>
    %c0_5 = arith.constant 0 : index
    %c0_6 = arith.constant 0 : index
    %16 = vector.load %arg3[%c0_5, %c0_6] : memref<64x256xf32, #tpu.memory_space<vmem>>, vector<64x256xf32>
    %cst_7 = arith.constant 0.000000e+00 : f32
    %17 = vector.broadcast %cst_7 : f32 to vector<8x64xf32>
    %cst_8 = arith.constant 0.000000e+00 : f32
    %18 = vector.broadcast %cst_8 : f32 to vector<8x64xf32>
    %19 = vector.extract_strided_slice %15 {offsets = [0, 0], sizes = [8, 256], strides = [1, 1]} : vector<64x256xf32> to vector<8x256xf32>
    %cst_9 = arith.constant dense<0.000000e+00> : vector<8x256xf32>
    %20 = tpu.matmul %17, %16, %cst_9 {dimension_numbers = #tpu.dot_dimension_numbers<[1], [0], [0], [1], [0, 0, 1, 1], [], []>} : vector<8x64xf32>, vector<64x256xf32>, vector<8x256xf32> -> vector<8x256xf32>
    %21 = arith.addf %19, %20 : vector<8x256xf32>
    %22 = vector.extract_strided_slice %21 {offsets = [0, 0], sizes = [8, 192], strides = [1, 1]} : vector<8x256xf32> to vector<8x192xf32>
    %23 = arith.negf %22 : vector<8x192xf32>
    %24 = math.exp %23 : vector<8x192xf32>
    %cst_10 = arith.constant 1.000000e+00 : f32
    %25 = vector.broadcast %cst_10 : f32 to vector<8x192xf32>
    %26 = arith.addf %25, %24 : vector<8x192xf32>
    %27 = arith.divf %25, %26 : vector<8x192xf32>
    %28 = vector.extract_strided_slice %21 {offsets = [0, 192], sizes = [8, 64], strides = [1, 1]} : vector<8x256xf32> to vector<8x64xf32>
    %29 = math.tanh %28 : vector<8x64xf32>
    %30 = vector.extract_strided_slice %27 {offsets = [0, 0], sizes = [8, 64], strides = [1, 1]} : vector<8x192xf32> to vector<8x64xf32>
    %31 = vector.extract_strided_slice %27 {offsets = [0, 64], sizes = [8, 64], strides = [1, 1]} : vector<8x192xf32> to vector<8x64xf32>
    %32 = vector.extract_strided_slice %27 {offsets = [0, 128], sizes = [8, 64], strides = [1, 1]} : vector<8x192xf32> to vector<8x64xf32>
    %33 = arith.mulf %31, %18 : vector<8x64xf32>
    %34 = arith.mulf %30, %29 : vector<8x64xf32>
    %35 = arith.addf %33, %34 : vector<8x64xf32>
    %36 = math.tanh %35 : vector<8x64xf32>
    %37 = arith.mulf %32, %36 : vector<8x64xf32>
    %38 = vector.extract_strided_slice %15 {offsets = [8, 0], sizes = [8, 256], strides = [1, 1]} : vector<64x256xf32> to vector<8x256xf32>
    %cst_11 = arith.constant dense<0.000000e+00> : vector<8x256xf32>
    %39 = tpu.matmul %37, %16, %cst_11 {dimension_numbers = #tpu.dot_dimension_numbers<[1], [0], [0], [1], [0, 0, 1, 1], [], []>} : vector<8x64xf32>, vector<64x256xf32>, vector<8x256xf32> -> vector<8x256xf32>
    %40 = arith.addf %38, %39 : vector<8x256xf32>
    %41 = vector.extract_strided_slice %40 {offsets = [0, 0], sizes = [8, 192], strides = [1, 1]} : vector<8x256xf32> to vector<8x192xf32>
    %42 = arith.negf %41 : vector<8x192xf32>
    %43 = math.exp %42 : vector<8x192xf32>
    %cst_12 = arith.constant 1.000000e+00 : f32
    %44 = vector.broadcast %cst_12 : f32 to vector<8x192xf32>
    %45 = arith.addf %44, %43 : vector<8x192xf32>
    %46 = arith.divf %44, %45 : vector<8x192xf32>
    %47 = vector.extract_strided_slice %40 {offsets = [0, 192], sizes = [8, 64], strides = [1, 1]} : vector<8x256xf32> to vector<8x64xf32>
    %48 = math.tanh %47 : vector<8x64xf32>
    %49 = vector.extract_strided_slice %46 {offsets = [0, 0], sizes = [8, 64], strides = [1, 1]} : vector<8x192xf32> to vector<8x64xf32>
    %50 = vector.extract_strided_slice %46 {offsets = [0, 64], sizes = [8, 64], strides = [1, 1]} : vector<8x192xf32> to vector<8x64xf32>
    %51 = vector.extract_strided_slice %46 {offsets = [0, 128], sizes = [8, 64], strides = [1, 1]} : vector<8x192xf32> to vector<8x64xf32>
    %52 = arith.mulf %50, %35 : vector<8x64xf32>
    %53 = arith.mulf %49, %48 : vector<8x64xf32>
    %54 = arith.addf %52, %53 : vector<8x64xf32>
    %55 = math.tanh %54 : vector<8x64xf32>
    %56 = arith.mulf %51, %55 : vector<8x64xf32>
    %57 = vector.extract_strided_slice %15 {offsets = [16, 0], sizes = [8, 256], strides = [1, 1]} : vector<64x256xf32> to vector<8x256xf32>
    %cst_13 = arith.constant dense<0.000000e+00> : vector<8x256xf32>
    %58 = tpu.matmul %56, %16, %cst_13 {dimension_numbers = #tpu.dot_dimension_numbers<[1], [0], [0], [1], [0, 0, 1, 1], [], []>} : vector<8x64xf32>, vector<64x256xf32>, vector<8x256xf32> -> vector<8x256xf32>
    %59 = arith.addf %57, %58 : vector<8x256xf32>
    %60 = vector.extract_strided_slice %59 {offsets = [0, 0], sizes = [8, 192], strides = [1, 1]} : vector<8x256xf32> to vector<8x192xf32>
    %61 = arith.negf %60 : vector<8x192xf32>
    %62 = math.exp %61 : vector<8x192xf32>
    %cst_14 = arith.constant 1.000000e+00 : f32
    %63 = vector.broadcast %cst_14 : f32 to vector<8x192xf32>
    %64 = arith.addf %63, %62 : vector<8x192xf32>
    %65 = arith.divf %63, %64 : vector<8x192xf32>
    %66 = vector.extract_strided_slice %59 {offsets = [0, 192], sizes = [8, 64], strides = [1, 1]} : vector<8x256xf32> to vector<8x64xf32>
    %67 = math.tanh %66 : vector<8x64xf32>
    %68 = vector.extract_strided_slice %65 {offsets = [0, 0], sizes = [8, 64], strides = [1, 1]} : vector<8x192xf32> to vector<8x64xf32>
    %69 = vector.extract_strided_slice %65 {offsets = [0, 64], sizes = [8, 64], strides = [1, 1]} : vector<8x192xf32> to vector<8x64xf32>
    %70 = vector.extract_strided_slice %65 {offsets = [0, 128], sizes = [8, 64], strides = [1, 1]} : vector<8x192xf32> to vector<8x64xf32>
    %71 = arith.mulf %69, %54 : vector<8x64xf32>
    %72 = arith.mulf %68, %67 : vector<8x64xf32>
    %73 = arith.addf %71, %72 : vector<8x64xf32>
    %74 = math.tanh %73 : vector<8x64xf32>
    %75 = arith.mulf %70, %74 : vector<8x64xf32>
    %76 = vector.extract_strided_slice %15 {offsets = [24, 0], sizes = [8, 256], strides = [1, 1]} : vector<64x256xf32> to vector<8x256xf32>
    %cst_15 = arith.constant dense<0.000000e+00> : vector<8x256xf32>
    %77 = tpu.matmul %75, %16, %cst_15 {dimension_numbers = #tpu.dot_dimension_numbers<[1], [0], [0], [1], [0, 0, 1, 1], [], []>} : vector<8x64xf32>, vector<64x256xf32>, vector<8x256xf32> -> vector<8x256xf32>
    %78 = arith.addf %76, %77 : vector<8x256xf32>
    %79 = vector.extract_strided_slice %78 {offsets = [0, 0], sizes = [8, 192], strides = [1, 1]} : vector<8x256xf32> to vector<8x192xf32>
    %80 = arith.negf %79 : vector<8x192xf32>
    %81 = math.exp %80 : vector<8x192xf32>
    %cst_16 = arith.constant 1.000000e+00 : f32
    %82 = vector.broadcast %cst_16 : f32 to vector<8x192xf32>
    %83 = arith.addf %82, %81 : vector<8x192xf32>
    %84 = arith.divf %82, %83 : vector<8x192xf32>
    %85 = vector.extract_strided_slice %78 {offsets = [0, 192], sizes = [8, 64], strides = [1, 1]} : vector<8x256xf32> to vector<8x64xf32>
    %86 = math.tanh %85 : vector<8x64xf32>
    %87 = vector.extract_strided_slice %84 {offsets = [0, 0], sizes = [8, 64], strides = [1, 1]} : vector<8x192xf32> to vector<8x64xf32>
    %88 = vector.extract_strided_slice %84 {offsets = [0, 64], sizes = [8, 64], strides = [1, 1]} : vector<8x192xf32> to vector<8x64xf32>
    %89 = vector.extract_strided_slice %84 {offsets = [0, 128], sizes = [8, 64], strides = [1, 1]} : vector<8x192xf32> to vector<8x64xf32>
    %90 = arith.mulf %88, %73 : vector<8x64xf32>
    %91 = arith.mulf %87, %86 : vector<8x64xf32>
    %92 = arith.addf %90, %91 : vector<8x64xf32>
    %93 = math.tanh %92 : vector<8x64xf32>
    %94 = arith.mulf %89, %93 : vector<8x64xf32>
    %95 = vector.extract_strided_slice %15 {offsets = [32, 0], sizes = [8, 256], strides = [1, 1]} : vector<64x256xf32> to vector<8x256xf32>
    %cst_17 = arith.constant dense<0.000000e+00> : vector<8x256xf32>
    %96 = tpu.matmul %94, %16, %cst_17 {dimension_numbers = #tpu.dot_dimension_numbers<[1], [0], [0], [1], [0, 0, 1, 1], [], []>} : vector<8x64xf32>, vector<64x256xf32>, vector<8x256xf32> -> vector<8x256xf32>
    %97 = arith.addf %95, %96 : vector<8x256xf32>
    %98 = vector.extract_strided_slice %97 {offsets = [0, 0], sizes = [8, 192], strides = [1, 1]} : vector<8x256xf32> to vector<8x192xf32>
    %99 = arith.negf %98 : vector<8x192xf32>
    %100 = math.exp %99 : vector<8x192xf32>
    %cst_18 = arith.constant 1.000000e+00 : f32
    %101 = vector.broadcast %cst_18 : f32 to vector<8x192xf32>
    %102 = arith.addf %101, %100 : vector<8x192xf32>
    %103 = arith.divf %101, %102 : vector<8x192xf32>
    %104 = vector.extract_strided_slice %97 {offsets = [0, 192], sizes = [8, 64], strides = [1, 1]} : vector<8x256xf32> to vector<8x64xf32>
    %105 = math.tanh %104 : vector<8x64xf32>
    %106 = vector.extract_strided_slice %103 {offsets = [0, 0], sizes = [8, 64], strides = [1, 1]} : vector<8x192xf32> to vector<8x64xf32>
    %107 = vector.extract_strided_slice %103 {offsets = [0, 64], sizes = [8, 64], strides = [1, 1]} : vector<8x192xf32> to vector<8x64xf32>
    %108 = vector.extract_strided_slice %103 {offsets = [0, 128], sizes = [8, 64], strides = [1, 1]} : vector<8x192xf32> to vector<8x64xf32>
    %109 = arith.mulf %107, %92 : vector<8x64xf32>
    %110 = arith.mulf %106, %105 : vector<8x64xf32>
    %111 = arith.addf %109, %110 : vector<8x64xf32>
    %112 = math.tanh %111 : vector<8x64xf32>
    %113 = arith.mulf %108, %112 : vector<8x64xf32>
    %114 = vector.extract_strided_slice %15 {offsets = [40, 0], sizes = [8, 256], strides = [1, 1]} : vector<64x256xf32> to vector<8x256xf32>
    %cst_19 = arith.constant dense<0.000000e+00> : vector<8x256xf32>
    %115 = tpu.matmul %113, %16, %cst_19 {dimension_numbers = #tpu.dot_dimension_numbers<[1], [0], [0], [1], [0, 0, 1, 1], [], []>} : vector<8x64xf32>, vector<64x256xf32>, vector<8x256xf32> -> vector<8x256xf32>
    %116 = arith.addf %114, %115 : vector<8x256xf32>
    %117 = vector.extract_strided_slice %116 {offsets = [0, 0], sizes = [8, 192], strides = [1, 1]} : vector<8x256xf32> to vector<8x192xf32>
    %118 = arith.negf %117 : vector<8x192xf32>
    %119 = math.exp %118 : vector<8x192xf32>
    %cst_20 = arith.constant 1.000000e+00 : f32
    %120 = vector.broadcast %cst_20 : f32 to vector<8x192xf32>
    %121 = arith.addf %120, %119 : vector<8x192xf32>
    %122 = arith.divf %120, %121 : vector<8x192xf32>
    %123 = vector.extract_strided_slice %116 {offsets = [0, 192], sizes = [8, 64], strides = [1, 1]} : vector<8x256xf32> to vector<8x64xf32>
    %124 = math.tanh %123 : vector<8x64xf32>
    %125 = vector.extract_strided_slice %122 {offsets = [0, 0], sizes = [8, 64], strides = [1, 1]} : vector<8x192xf32> to vector<8x64xf32>
    %126 = vector.extract_strided_slice %122 {offsets = [0, 64], sizes = [8, 64], strides = [1, 1]} : vector<8x192xf32> to vector<8x64xf32>
    %127 = vector.extract_strided_slice %122 {offsets = [0, 128], sizes = [8, 64], strides = [1, 1]} : vector<8x192xf32> to vector<8x64xf32>
    %128 = arith.mulf %126, %111 : vector<8x64xf32>
    %129 = arith.mulf %125, %124 : vector<8x64xf32>
    %130 = arith.addf %128, %129 : vector<8x64xf32>
    %131 = math.tanh %130 : vector<8x64xf32>
    %132 = arith.mulf %127, %131 : vector<8x64xf32>
    %133 = vector.extract_strided_slice %15 {offsets = [48, 0], sizes = [8, 256], strides = [1, 1]} : vector<64x256xf32> to vector<8x256xf32>
    %cst_21 = arith.constant dense<0.000000e+00> : vector<8x256xf32>
    %134 = tpu.matmul %132, %16, %cst_21 {dimension_numbers = #tpu.dot_dimension_numbers<[1], [0], [0], [1], [0, 0, 1, 1], [], []>} : vector<8x64xf32>, vector<64x256xf32>, vector<8x256xf32> -> vector<8x256xf32>
    %135 = arith.addf %133, %134 : vector<8x256xf32>
    %136 = vector.extract_strided_slice %135 {offsets = [0, 0], sizes = [8, 192], strides = [1, 1]} : vector<8x256xf32> to vector<8x192xf32>
    %137 = arith.negf %136 : vector<8x192xf32>
    %138 = math.exp %137 : vector<8x192xf32>
    %cst_22 = arith.constant 1.000000e+00 : f32
    %139 = vector.broadcast %cst_22 : f32 to vector<8x192xf32>
    %140 = arith.addf %139, %138 : vector<8x192xf32>
    %141 = arith.divf %139, %140 : vector<8x192xf32>
    %142 = vector.extract_strided_slice %135 {offsets = [0, 192], sizes = [8, 64], strides = [1, 1]} : vector<8x256xf32> to vector<8x64xf32>
    %143 = math.tanh %142 : vector<8x64xf32>
    %144 = vector.extract_strided_slice %141 {offsets = [0, 0], sizes = [8, 64], strides = [1, 1]} : vector<8x192xf32> to vector<8x64xf32>
    %145 = vector.extract_strided_slice %141 {offsets = [0, 64], sizes = [8, 64], strides = [1, 1]} : vector<8x192xf32> to vector<8x64xf32>
    %146 = vector.extract_strided_slice %141 {offsets = [0, 128], sizes = [8, 64], strides = [1, 1]} : vector<8x192xf32> to vector<8x64xf32>
    %147 = arith.mulf %145, %130 : vector<8x64xf32>
    %148 = arith.mulf %144, %143 : vector<8x64xf32>
    %149 = arith.addf %147, %148 : vector<8x64xf32>
    %150 = math.tanh %149 : vector<8x64xf32>
    %151 = arith.mulf %146, %150 : vector<8x64xf32>
    %152 = vector.extract_strided_slice %15 {offsets = [56, 0], sizes = [8, 256], strides = [1, 1]} : vector<64x256xf32> to vector<8x256xf32>
    %cst_23 = arith.constant dense<0.000000e+00> : vector<8x256xf32>
    %153 = tpu.matmul %151, %16, %cst_23 {dimension_numbers = #tpu.dot_dimension_numbers<[1], [0], [0], [1], [0, 0, 1, 1], [], []>} : vector<8x64xf32>, vector<64x256xf32>, vector<8x256xf32> -> vector<8x256xf32>
    %154 = arith.addf %152, %153 : vector<8x256xf32>
    %155 = vector.extract_strided_slice %154 {offsets = [0, 0], sizes = [8, 192], strides = [1, 1]} : vector<8x256xf32> to vector<8x192xf32>
    %156 = arith.negf %155 : vector<8x192xf32>
    %157 = math.exp %156 : vector<8x192xf32>
    %cst_24 = arith.constant 1.000000e+00 : f32
    %158 = vector.broadcast %cst_24 : f32 to vector<8x192xf32>
    %159 = arith.addf %158, %157 : vector<8x192xf32>
    %160 = arith.divf %158, %159 : vector<8x192xf32>
    %161 = vector.extract_strided_slice %154 {offsets = [0, 192], sizes = [8, 64], strides = [1, 1]} : vector<8x256xf32> to vector<8x64xf32>
    %162 = math.tanh %161 : vector<8x64xf32>
    %163 = vector.extract_strided_slice %160 {offsets = [0, 0], sizes = [8, 64], strides = [1, 1]} : vector<8x192xf32> to vector<8x64xf32>
    %164 = vector.extract_strided_slice %160 {offsets = [0, 64], sizes = [8, 64], strides = [1, 1]} : vector<8x192xf32> to vector<8x64xf32>
    %165 = vector.extract_strided_slice %160 {offsets = [0, 128], sizes = [8, 64], strides = [1, 1]} : vector<8x192xf32> to vector<8x64xf32>
    %166 = arith.mulf %164, %149 : vector<8x64xf32>
    %167 = arith.mulf %163, %162 : vector<8x64xf32>
    %168 = arith.addf %166, %167 : vector<8x64xf32>
    %169 = math.tanh %168 : vector<8x64xf32>
    %170 = arith.mulf %165, %169 : vector<8x64xf32>
    %171 = vector.extract_strided_slice %170 {offsets = [0, 0], sizes = [2, 64], strides = [1, 1]} : vector<8x64xf32> to vector<2x64xf32>
    %c0_25 = arith.constant 0 : index
    %c0_26 = arith.constant 0 : index
    %172 = vector.load %arg4[%c0_25, %c0_26] : memref<2x64xf32, #tpu.memory_space<vmem>>, vector<2x64xf32>
    tpu.vector_store %arg4[%c0_25, %c0_26], %171 {strides = array<i32>} : memref<2x64xf32, #tpu.memory_space<vmem>>, vector<2x64xf32>,
    return
  }
}

</mosaic_0001>

<llo_original>
// kernel: tpu_custom_call.1
$region0: #{tpu_custom_call.1}
  #allocation0 [shape = 'u32[]', space=smem, size = 0x4, offset = 0x4, fixed_abs, tag = 'smem constant byte address 0x4 - core index']
  #allocation1 [shape = 'u32[72,128]{1,0:T(1,128)}', space=vmem, size = 0x9000, scoped, tag = 'internal scratch']
  %s0 = inlined_call_operand.vmem [shape: s32[64,2], index: 0, kind: input, shape index: {}]
  %s1 = inlined_call_operand.vmem [shape: f32[12,256], index: 1, kind: input, shape index: {}]
  %s2 = inlined_call_operand.vmem [shape: f32[1,256], index: 2, kind: input, shape index: {}]
  %s3 = inlined_call_operand.hbm [shape: f32[64,256], index: 3, kind: input, shape index: {}]
  %s4 = inlined_call_operand.hbm [shape: f32[2,64], index: 4, kind: output, shape index: {}]
  %s5 = sld [smem:[#allocation0]]
  $region30: #{tpu_custom_call.1} parent=0
    _
  %s7 = ssub.s32 1, %s5
  %s8 = scalar_select 0, %s7, %s5
  $region1: #{tpu_custom_call.1} parent=0
    #allocation2 [shape = 'u8[65536]{0}', space=vmem, size = 0x10000, scoped, tag = 'input window, operand 3, single buffered']
    #allocation3 [shape = 's32[1]{0}', space=sflag, size = 0x4, scoped, tag = 'scoped memory for tpu_custom_call.1']
    #allocation4 [shape = 's32[1]{0}', space=sflag, size = 0x4, scoped, tag = 'scoped memory for tpu_custom_call.1']
    #allocation5 [shape = 'u8[1024]{0}', space=vmem, size = 0x400, scoped, tag = 'output window, operand 0, single buffered']
    %9 = vsyncpa [#allocation3], 0
    %10 = vsyncpa [#allocation4], 0
    // Predicated region
    $region2: #{tpu_custom_call.1} parent=1 // pred_check
      _
    $region3: #{tpu_custom_call.1} parent=1 // pred_check_branch
      %12 = sbr.rel (0) target = $region5
    $region4: #{tpu_custom_call.1} parent=1 // pred_region
      _
    $region5: #{tpu_custom_call.1} parent=1 // pred_fallthru
      _
    // Predicated region
    $region6: #{tpu_custom_call.1} parent=1 // pred_check
      _
    $region7: #{tpu_custom_call.1} parent=1 // pred_check_branch
      %14 = sbr.rel (0) target = $region9
    $region8: #{tpu_custom_call.1} parent=1 // pred_region
      _
    $region9: #{tpu_custom_call.1} parent=1 // pred_fallthru
      _
    // Predicated region
    $region10: #{tpu_custom_call.1} parent=1 // pred_check
      _
    $region11: #{tpu_custom_call.1} parent=1 // pred_check_branch
      %16 = sbr.rel (0) target = $region13
    $region12: #{tpu_custom_call.1} parent=1 // pred_region
      _
    $region13: #{tpu_custom_call.1} parent=1 // pred_fallthru
      _
    // Predicated region
    $region14: #{tpu_custom_call.1} parent=1 // pred_check
      _
    $region15: #{tpu_custom_call.1} parent=1 // pred_check_branch
      %18 = sbr.rel (0) target = $region17
    $region16: #{tpu_custom_call.1} parent=1 // pred_region
      %20 = vsyncadd [#allocation3], 0
      %s21 = sshll.u32 %s3, 4
      %s22 = int_to_ptr.hbm [resolvable:$true] %s21
      %s23 = sshll.u32 [#allocation2], 4
      %s24 = int_to_ptr.vmem [resolvable:$true] %s23
      %29 = dma.hbm_to_vmem [thread:$0]  %s22, 2048, %s24, [#allocation3], 256, 256, 16
    $region17: #{tpu_custom_call.1} parent=1 // pred_fallthru
      _
    // Predicated region
    $region18: #{tpu_custom_call.1} parent=1 // pred_check
      _
    $region19: #{tpu_custom_call.1} parent=1 // pred_check_branch
      %31 = sbr.rel (0) target = $region21
    $region20: #{tpu_custom_call.1} parent=1 // pred_region
      %33 = dma.done [#allocation3], 2048
    $region21: #{tpu_custom_call.1} parent=1 // pred_fallthru
      _
    %v34 = vld [vmem:[%s0] sm:$0xff]
    %v35 = vld [vmem:[%s0 + $0x8] sm:$0xff]
    %v36 = vld [vmem:[%s0 + $0x10] sm:$0xff]
    %v37 = vld [vmem:[%s0 + $0x18] sm:$0xff]
    %v38 = vld [vmem:[%s0 + $0x20] sm:$0xff]
    %v39 = vld [vmem:[%s0 + $0x28] sm:$0xff]
    %v40 = vld [vmem:[%s0 + $0x30] sm:$0xff]
    %v41 = vld [vmem:[%s0 + $0x38] sm:$0xff]
    %v42 = vlaneseq
    %v43 = vand.u32 %v42, 127
    %44 = vset.pattern.permute.xlu0 0
    %45 = vperm.xlu0 %44, %v34
    %v46 = vpop.permute.xlu0 %45
    %47 = vset.pattern.permute.xlu0 0
    %48 = vperm.xlu0 %47, %v35
    %v49 = vpop.permute.xlu0 %48
    %50 = vset.pattern.permute.xlu0 0
    %51 = vperm.xlu0 %50, %v36
    %v52 = vpop.permute.xlu0 %51
    %53 = vset.pattern.permute.xlu0 0
    %54 = vperm.xlu0 %53, %v37
    %v55 = vpop.permute.xlu0 %54
    %56 = vset.pattern.permute.xlu0 0
    %57 = vperm.xlu0 %56, %v38
    %v58 = vpop.permute.xlu0 %57
    %59 = vset.pattern.permute.xlu0 0
    %60 = vperm.xlu0 %59, %v39
    %v61 = vpop.permute.xlu0 %60
    %62 = vset.pattern.permute.xlu0 0
    %63 = vperm.xlu0 %62, %v40
    %v64 = vpop.permute.xlu0 %63
    %65 = vset.pattern.permute.xlu0 0
    %66 = vperm.xlu0 %65, %v41
    %v67 = vpop.permute.xlu0 %66
    %vm68 = vcmp.eq.s32.totalorder %v43, %v46
    %vm69 = vcmp.eq.s32.totalorder %v43, %v49
    %vm70 = vcmp.eq.s32.totalorder %v43, %v52
    %vm71 = vcmp.eq.s32.totalorder %v43, %v55
    %vm72 = vcmp.eq.s32.totalorder %v43, %v58
    %vm73 = vcmp.eq.s32.totalorder %v43, %v61
    %vm74 = vcmp.eq.s32.totalorder %v43, %v64
    %vm75 = vcmp.eq.s32.totalorder %v43, %v67
    %76 = vset.pattern.permute.xlu0 1
    %77 = vperm.xlu0 %76, %v34
    %v78 = vpop.permute.xlu0 %77
    %79 = vset.pattern.permute.xlu0 1
    %80 = vperm.xlu0 %79, %v35
    %v81 = vpop.permute.xlu0 %80
    %82 = vset.pattern.permute.xlu0 1
    %83 = vperm.xlu0 %82, %v36
    %v84 = vpop.permute.xlu0 %83
    %85 = vset.pattern.permute.xlu0 1
    %86 = vperm.xlu0 %85, %v37
    %v87 = vpop.permute.xlu0 %86
    %88 = vset.pattern.permute.xlu0 1
    %89 = vperm.xlu0 %88, %v38
    %v90 = vpop.permute.xlu0 %89
    %91 = vset.pattern.permute.xlu0 1
    %92 = vperm.xlu0 %91, %v39
    %v93 = vpop.permute.xlu0 %92
    %94 = vset.pattern.permute.xlu0 1
    %95 = vperm.xlu0 %94, %v40
    %v96 = vpop.permute.xlu0 %95
    %97 = vset.pattern.permute.xlu0 1
    %98 = vperm.xlu0 %97, %v41
    %v99 = vpop.permute.xlu0 %98
    %vm100 = vcmp.eq.s32.totalorder %v43, %v78
    %vm101 = vcmp.eq.s32.totalorder %v43, %v81
    %vm102 = vcmp.eq.s32.totalorder %v43, %v84
    %vm103 = vcmp.eq.s32.totalorder %v43, %v87
    %vm104 = vcmp.eq.s32.totalorder %v43, %v90
    %vm105 = vcmp.eq.s32.totalorder %v43, %v93
    %vm106 = vcmp.eq.s32.totalorder %v43, %v96
    %vm107 = vcmp.eq.s32.totalorder %v43, %v99
    %vm108 = vmor %vm68, %vm100
    %vm109 = vmor %vm69, %vm101
    %vm110 = vmor %vm70, %vm102
    %vm111 = vmor %vm71, %vm103
    %vm112 = vmor %vm72, %vm104
    %vm113 = vmor %vm73, %vm105
    %vm114 = vmor %vm74, %vm106
    %vm115 = vmor %vm75, %vm107
    %v116 = vsel %vm108, 1, 0
    %v117 = vsel %vm109, 1, 0
    %v118 = vsel %vm110, 1, 0
    %v119 = vsel %vm111, 1, 0
    %v120 = vsel %vm112, 1, 0
    %v121 = vsel %vm113, 1, 0
    %v122 = vsel %vm114, 1, 0
    %v123 = vsel %vm115, 1, 0
    %v124 = vcvt.s32.f32 %v116
    %v125 = vcvt.s32.f32 %v117
    %v126 = vcvt.s32.f32 %v118
    %v127 = vcvt.s32.f32 %v119
    %v128 = vcvt.s32.f32 %v120
    %v129 = vcvt.s32.f32 %v121
    %v130 = vcvt.s32.f32 %v122
    %v131 = vcvt.s32.f32 %v123
    %v132 = vld [vmem:[%s1] sm:$0xff]
    %v133 = vld [vmem:[%s1 + $0x8] sm:$0xff]
    %v134 = vld [vmem:[%s1 + $0x10] sm:$0xf]
    %v135 = vld [vmem:[%s1 + $0x18] sm:$0xf]
    %v136 = vld [vmem:[%s2] sm:$0x3]
    %v138 = vperm.slane %v136, 0
    %v139 = vperm.slane %v136, 1
    %vm142 = vcmask 97280
    %v144 = vsel %vm142, %v124, 0
    %v147 = vsel %vm142, %v125, 0
    %v150 = vsel %vm142, %v126, 0
    %v153 = vsel %vm142, %v127, 0
    %v156 = vsel %vm142, %v128, 0
    %v159 = vsel %vm142, %v129, 0
    %v162 = vsel %vm142, %v130, 0
    %v165 = vsel %vm142, %v131, 0
    %vm167 = vcmask 1043456
    %v169 = vsel %vm167, %v134, 0
    %v172 = vsel %vm167, %v135, 0
    %174 = vmatpush.msra.mxu0 0.0
    %175 = vmatpush.msra.mxu0 0.0
    %176 = vmatpush.msra.mxu0 0.0
    %177 = vmatpush.msra.mxu0 0.0
    %178 = vmatpush.msra.mxu0 0.0
    %179 = vmatpush.msra.mxu0 0.0
    %180 = vmatpush.msra.mxu0 0.0
    %181 = vmatpush.msra.mxu0 0.0
    %182 = vmatpush.msra.mxu0 0.0
    %183 = vmatpush.msra.mxu0 0.0
    %184 = vmatpush.msra.mxu0 0.0
    %185 = vmatpush.msra.mxu0 0.0
    %186 = vmatpush.msra.mxu0 0.0
    %187 = vmatpush.msra.mxu0 0.0
    %188 = vmatpush.msra.mxu0 %v169
    %189 = vmatpush.msra.mxu0 %v132
    %190 = vmatmul.f32.gmra.mxu0 %v144
    %v191 = vpop.f32.mrf.mxu0
    %v192 = vadd.f32 %v138, %v191
    %193 = vmatmul.f32.gmra.mxu0 %v147
    %v194 = vpop.f32.mrf.mxu0
    %v195 = vadd.f32 %v138, %v194
    %196 = vmatmul.f32.gmra.mxu0 %v150
    %v197 = vpop.f32.mrf.mxu0
    %v198 = vadd.f32 %v138, %v197
    %199 = vmatmul.f32.gmra.mxu0 %v153
    %v200 = vpop.f32.mrf.mxu0
    %v201 = vadd.f32 %v138, %v200
    %202 = vmatmul.f32.gmra.mxu0 %v156
    %v203 = vpop.f32.mrf.mxu0
    %v204 = vadd.f32 %v138, %v203
    %205 = vmatmul.f32.gmra.mxu0 %v159
    %v206 = vpop.f32.mrf.mxu0
    %v207 = vadd.f32 %v138, %v206
    %208 = vmatmul.f32.gmra.mxu0 %v162
    %v209 = vpop.f32.mrf.mxu0
    %v210 = vadd.f32 %v138, %v209
    %211 = vmatmul.f32.gmra.mxu0 %v165
    %v212 = vpop.f32.mrf.mxu0
    %v213 = vadd.f32 %v138, %v212
    %214 = vdwg.mxu0
    %215 = vmatpush.msra.mxu0 0.0
    %216 = vmatpush.msra.mxu0 0.0
    %217 = vmatpush.msra.mxu0 0.0
    %218 = vmatpush.msra.mxu0 0.0
    %219 = vmatpush.msra.mxu0 0.0
    %220 = vmatpush.msra.mxu0 0.0
    %221 = vmatpush.msra.mxu0 0.0
    %222 = vmatpush.msra.mxu0 0.0
    %223 = vmatpush.msra.mxu0 0.0
    %224 = vmatpush.msra.mxu0 0.0
    %225 = vmatpush.msra.mxu0 0.0
    %226 = vmatpush.msra.mxu0 0.0
    %227 = vmatpush.msra.mxu0 0.0
    %228 = vmatpush.msra.mxu0 0.0
    %229 = vmatpush.msra.mxu0 %v172
    %230 = vmatpush.msra.mxu0 %v133
    %231 = vmatmul.f32.gmra.mxu0 %v144
    %v232 = vpop.f32.mrf.mxu0
    %v233 = vadd.f32 %v139, %v232
    %234 = vmatmul.f32.gmra.mxu0 %v147
    %v235 = vpop.f32.mrf.mxu0
    %v236 = vadd.f32 %v139, %v235
    %237 = vmatmul.f32.gmra.mxu0 %v150
    %v238 = vpop.f32.mrf.mxu0
    %v239 = vadd.f32 %v139, %v238
    %240 = vmatmul.f32.gmra.mxu0 %v153
    %v241 = vpop.f32.mrf.mxu0
    %v242 = vadd.f32 %v139, %v241
    %243 = vmatmul.f32.gmra.mxu0 %v156
    %v244 = vpop.f32.mrf.mxu0
    %v245 = vadd.f32 %v139, %v244
    %246 = vmatmul.f32.gmra.mxu0 %v159
    %v247 = vpop.f32.mrf.mxu0
    %v248 = vadd.f32 %v139, %v247
    %249 = vmatmul.f32.gmra.mxu0 %v162
    %v250 = vpop.f32.mrf.mxu0
    %v251 = vadd.f32 %v139, %v250
    %252 = vmatmul.f32.gmra.mxu0 %v165
    %v253 = vpop.f32.mrf.mxu0
    %v254 = vadd.f32 %v139, %v253
    %255 = vdwg.mxu0
    %v256 = vld [vmem:[#allocation2] sm:$0xff]
    %v257 = vld [vmem:[#allocation2 + $0x8] sm:$0xff]
    %v258 = vld [vmem:[#allocation2 + $0x10] sm:$0xff]
    %v259 = vld [vmem:[#allocation2 + $0x18] sm:$0xff]
    %v260 = vld [vmem:[#allocation2 + $0x20] sm:$0xff]
    %v261 = vld [vmem:[#allocation2 + $0x28] sm:$0xff]
    %v262 = vld [vmem:[#allocation2 + $0x30] sm:$0xff]
    %v263 = vld [vmem:[#allocation2 + $0x38] sm:$0xff]
    %v264 = vld [vmem:[#allocation2 + $0x40] sm:$0xff]
    %v265 = vld [vmem:[#allocation2 + $0x48] sm:$0xff]
    %v266 = vld [vmem:[#allocation2 + $0x50] sm:$0xff]
    %v267 = vld [vmem:[#allocation2 + $0x58] sm:$0xff]
    %v268 = vld [vmem:[#allocation2 + $0x60] sm:$0xff]
    %v269 = vld [vmem:[#allocation2 + $0x68] sm:$0xff]
    %v270 = vld [vmem:[#allocation2 + $0x70] sm:$0xff]
    %v271 = vld [vmem:[#allocation2 + $0x78] sm:$0xff]
    %vm272 = vcmask 523264
    %v274 = vsel %vm272, 0.0, 0
    %276 = vmatpush.msra.mxu0 0.0
    %277 = vmatpush.msra.mxu0 0.0
    %278 = vmatpush.msra.mxu0 0.0
    %279 = vmatpush.msra.mxu0 0.0
    %280 = vmatpush.msra.mxu0 0.0
    %281 = vmatpush.msra.mxu0 0.0
    %282 = vmatpush.msra.mxu0 0.0
    %283 = vmatpush.msra.mxu0 0.0
    %284 = vmatpush.msra.mxu0 %v270
    %285 = vmatpush.msra.mxu0 %v268
    %286 = vmatpush.msra.mxu0 %v266
    %287 = vmatpush.msra.mxu0 %v264
    %288 = vmatpush.msra.mxu0 %v262
    %289 = vmatpush.msra.mxu0 %v260
    %290 = vmatpush.msra.mxu0 %v258
    %291 = vmatpush.msra.mxu0 %v256
    %292 = vmatmul.f32.gmra.mxu0 %v274
    %v293 = vpop.f32.mrf.mxu0
    %v294 = vadd.f32 0.0, %v293
    %295 = vdwg.mxu0
    %296 = vmatpush.msra.mxu0 0.0
    %297 = vmatpush.msra.mxu0 0.0
    %298 = vmatpush.msra.mxu0 0.0
    %299 = vmatpush.msra.mxu0 0.0
    %300 = vmatpush.msra.mxu0 0.0
    %301 = vmatpush.msra.mxu0 0.0
    %302 = vmatpush.msra.mxu0 0.0
    %303 = vmatpush.msra.mxu0 0.0
    %304 = vmatpush.msra.mxu0 %v271
    %305 = vmatpush.msra.mxu0 %v269
    %306 = vmatpush.msra.mxu0 %v267
    %307 = vmatpush.msra.mxu0 %v265
    %308 = vmatpush.msra.mxu0 %v263
    %309 = vmatpush.msra.mxu0 %v261
    %310 = vmatpush.msra.mxu0 %v259
    %311 = vmatpush.msra.mxu0 %v257
    %312 = vmatmul.f32.gmra.mxu0 %v274
    %v313 = vpop.f32.mrf.mxu0
    %v314 = vadd.f32 0.0, %v313
    %315 = vdwg.mxu0
    %v316 = vadd.f32 %v192, %v294
    %v317 = vadd.f32 %v233, %v314
    %v318 = vxor.u32 %v316, 2147483648
    %v319 = vxor.u32 %v317, 2147483648
    %v320 = vmul.f32 %v318, 1.442695
    %v321 = vpow.pop %v320
    %v322 = vmul.f32 %v319, 1.442695
    %v323 = vpow.pop %v322
    %v324 = vadd.f32 %v321, 1.0
    %v325 = vadd.f32 %v323, 1.0
    %v326 = vrcp.pop %v324
    %v327 = vmul.f32 %v324, %v326
    %v328 = vsub.f32 1.0, %v327
    %v329 = vmul.f32 %v326, %v328
    %v330 = vadd.f32 %v326, %v329
    %vm331 = vweird.f32 %v324
    %vm332 = vweird.f32 %v326
    %vm333 = vmor %vm331, %vm332
    %v334 = vsel %vm333, %v326, %v330
    %v335 = vand.u32 2147483647, %v324
    %vm336 = vcmp.eq.f32.partialorder %v335, 8.507059e+37
    %v337 = vand.u32 %v324, 2147483648
    %v338 = vor.u32 1.1754944e-38, %v337
    %v339 = vsel %vm336, %v338, %v334
    %v340 = vmul.f32 1.0, %v339
    %v341 = vrcp.pop %v325
    %v342 = vmul.f32 %v325, %v341
    %v343 = vsub.f32 1.0, %v342
    %v344 = vmul.f32 %v341, %v343
    %v345 = vadd.f32 %v341, %v344
    %vm346 = vweird.f32 %v325
    %vm347 = vweird.f32 %v341
    %vm348 = vmor %vm346, %vm347
    %v349 = vsel %vm348, %v341, %v345
    %v350 = vand.u32 2147483647, %v325
    %vm351 = vcmp.eq.f32.partialorder %v350, 8.507059e+37
    %v352 = vand.u32 %v325, 2147483648
    %v353 = vor.u32 1.1754944e-38, %v352
    %v354 = vsel %vm351, %v353, %v349
    %v355 = vmul.f32 1.0, %v354
    %v356 = vtanh.pop %v317
    %v357 = vmul.f32 %v340, 0.0
    %359 = vrot.lane.b32.xlu0 %v356, 64
    %v360 = vpop.permute.xlu0 %359
    %v362 = vmul.f32 %v340, %v360
    %364 = vrot.lane.b32.xlu0 %v362, 64
    %v365 = vpop.permute.xlu0 %364
    %v367 = vadd.f32 %v357, %v365
    %v368 = vtanh.pop %v367
    %370 = vrot.lane.b32.xlu0 %v368, 64
    %v371 = vpop.permute.xlu0 %370
    %v373 = vmul.f32 %v355, %v371
    %v375 = vsel %vm272, %v373, 0
    %377 = vmatpush.msra.mxu0 0.0
    %378 = vmatpush.msra.mxu0 0.0
    %379 = vmatpush.msra.mxu0 0.0
    %380 = vmatpush.msra.mxu0 0.0
    %381 = vmatpush.msra.mxu0 0.0
    %382 = vmatpush.msra.mxu0 0.0
    %383 = vmatpush.msra.mxu0 0.0
    %384 = vmatpush.msra.mxu0 0.0
    %385 = vmatpush.msra.mxu0 %v270
    %386 = vmatpush.msra.mxu0 %v268
    %387 = vmatpush.msra.mxu0 %v266
    %388 = vmatpush.msra.mxu0 %v264
    %389 = vmatpush.msra.mxu0 %v262
    %390 = vmatpush.msra.mxu0 %v260
    %391 = vmatpush.msra.mxu0 %v258
    %392 = vmatpush.msra.mxu0 %v256
    %393 = vmatmul.f32.gmra.mxu0 %v375
    %v394 = vpop.f32.mrf.mxu0
    %v395 = vadd.f32 0.0, %v394
    %396 = vdwg.mxu0
    %397 = vmatpush.msra.mxu0 0.0
    %398 = vmatpush.msra.mxu0 0.0
    %399 = vmatpush.msra.mxu0 0.0
    %400 = vmatpush.msra.mxu0 0.0
    %401 = vmatpush.msra.mxu0 0.0
    %402 = vmatpush.msra.mxu0 0.0
    %403 = vmatpush.msra.mxu0 0.0
    %404 = vmatpush.msra.mxu0 0.0
    %405 = vmatpush.msra.mxu0 %v271
    %406 = vmatpush.msra.mxu0 %v269
    %407 = vmatpush.msra.mxu0 %v267
    %408 = vmatpush.msra.mxu0 %v265
    %409 = vmatpush.msra.mxu0 %v263
    %410 = vmatpush.msra.mxu0 %v261
    %411 = vmatpush.msra.mxu0 %v259
    %412 = vmatpush.msra.mxu0 %v257
    %413 = vmatmul.f32.gmra.mxu0 %v375
    %v414 = vpop.f32.mrf.mxu0
    %v415 = vadd.f32 0.0, %v414
    %416 = vdwg.mxu0
    %v417 = vadd.f32 %v195, %v395
    %v418 = vadd.f32 %v236, %v415
    %v419 = vxor.u32 %v417, 2147483648
    %v420 = vxor.u32 %v418, 2147483648
    %v421 = vmul.f32 %v419, 1.442695
    %v422 = vpow.pop %v421
    %v423 = vmul.f32 %v420, 1.442695
    %v424 = vpow.pop %v423
    %v425 = vadd.f32 %v422, 1.0
    %v426 = vadd.f32 %v424, 1.0
    %v427 = vrcp.pop %v425
    %v428 = vmul.f32 %v425, %v427
    %v429 = vsub.f32 1.0, %v428
    %v430 = vmul.f32 %v427, %v429
    %v431 = vadd.f32 %v427, %v430
    %vm432 = vweird.f32 %v425
    %vm433 = vweird.f32 %v427
    %vm434 = vmor %vm432, %vm433
    %v435 = vsel %vm434, %v427, %v431
    %v436 = vand.u32 2147483647, %v425
    %vm437 = vcmp.eq.f32.partialorder %v436, 8.507059e+37
    %v438 = vand.u32 %v425, 2147483648
    %v439 = vor.u32 1.1754944e-38, %v438
    %v440 = vsel %vm437, %v439, %v435
    %v441 = vmul.f32 1.0, %v440
    %v442 = vrcp.pop %v426
    %v443 = vmul.f32 %v426, %v442
    %v444 = vsub.f32 1.0, %v443
    %v445 = vmul.f32 %v442, %v444
    %v446 = vadd.f32 %v442, %v445
    %vm447 = vweird.f32 %v426
    %vm448 = vweird.f32 %v442
    %vm449 = vmor %vm447, %vm448
    %v450 = vsel %vm449, %v442, %v446
    %v451 = vand.u32 2147483647, %v426
    %vm452 = vcmp.eq.f32.partialorder %v451, 8.507059e+37
    %v453 = vand.u32 %v426, 2147483648
    %v454 = vor.u32 1.1754944e-38, %v453
    %v455 = vsel %vm452, %v454, %v450
    %v456 = vmul.f32 1.0, %v455
    %v457 = vtanh.pop %v418
    %v458 = vmul.f32 %v441, %v367
    %460 = vrot.lane.b32.xlu0 %v457, 64
    %v461 = vpop.permute.xlu0 %460
    %v463 = vmul.f32 %v441, %v461
    %465 = vrot.lane.b32.xlu0 %v463, 64
    %v466 = vpop.permute.xlu0 %465
    %v468 = vadd.f32 %v458, %v466
    %v469 = vtanh.pop %v468
    %471 = vrot.lane.b32.xlu0 %v469, 64
    %v472 = vpop.permute.xlu0 %471
    %v474 = vmul.f32 %v456, %v472
    %v476 = vsel %vm272, %v474, 0
    %478 = vmatpush.msra.mxu0 0.0
    %479 = vmatpush.msra.mxu0 0.0
    %480 = vmatpush.msra.mxu0 0.0
    %481 = vmatpush.msra.mxu0 0.0
    %482 = vmatpush.msra.mxu0 0.0
    %483 = vmatpush.msra.mxu0 0.0
    %484 = vmatpush.msra.mxu0 0.0
    %485 = vmatpush.msra.mxu0 0.0
    %486 = vmatpush.msra.mxu0 %v270
    %487 = vmatpush.msra.mxu0 %v268
    %488 = vmatpush.msra.mxu0 %v266
    %489 = vmatpush.msra.mxu0 %v264
    %490 = vmatpush.msra.mxu0 %v262
    %491 = vmatpush.msra.mxu0 %v260
    %492 = vmatpush.msra.mxu0 %v258
    %493 = vmatpush.msra.mxu0 %v256
    %494 = vmatmul.f32.gmra.mxu0 %v476
    %v495 = vpop.f32.mrf.mxu0
    %v496 = vadd.f32 0.0, %v495
    %497 = vdwg.mxu0
    %498 = vmatpush.msra.mxu0 0.0
    %499 = vmatpush.msra.mxu0 0.0
    %500 = vmatpush.msra.mxu0 0.0
    %501 = vmatpush.msra.mxu0 0.0
    %502 = vmatpush.msra.mxu0 0.0
    %503 = vmatpush.msra.mxu0 0.0
    %504 = vmatpush.msra.mxu0 0.0
    %505 = vmatpush.msra.mxu0 0.0
    %506 = vmatpush.msra.mxu0 %v271
    %507 = vmatpush.msra.mxu0 %v269
    %508 = vmatpush.msra.mxu0 %v267
    %509 = vmatpush.msra.mxu0 %v265
    %510 = vmatpush.msra.mxu0 %v263
    %511 = vmatpush.msra.mxu0 %v261
    %512 = vmatpush.msra.mxu0 %v259
    %513 = vmatpush.msra.mxu0 %v257
    %514 = vmatmul.f32.gmra.mxu0 %v476
    %v515 = vpop.f32.mrf.mxu0
    %v516 = vadd.f32 0.0, %v515
    %517 = vdwg.mxu0
    %v518 = vadd.f32 %v198, %v496
    %v519 = vadd.f32 %v239, %v516
    %v520 = vxor.u32 %v518, 2147483648
    %v521 = vxor.u32 %v519, 2147483648
    %v522 = vmul.f32 %v520, 1.442695
    %v523 = vpow.pop %v522
    %v524 = vmul.f32 %v521, 1.442695
    %v525 = vpow.pop %v524
    %v526 = vadd.f32 %v523, 1.0
    %v527 = vadd.f32 %v525, 1.0
    %v528 = vrcp.pop %v526
    %v529 = vmul.f32 %v526, %v528
    %v530 = vsub.f32 1.0, %v529
    %v531 = vmul.f32 %v528, %v530
    %v532 = vadd.f32 %v528, %v531
    %vm533 = vweird.f32 %v526
    %vm534 = vweird.f32 %v528
    %vm535 = vmor %vm533, %vm534
    %v536 = vsel %vm535, %v528, %v532
    %v537 = vand.u32 2147483647, %v526
    %vm538 = vcmp.eq.f32.partialorder %v537, 8.507059e+37
    %v539 = vand.u32 %v526, 2147483648
    %v540 = vor.u32 1.1754944e-38, %v539
    %v541 = vsel %vm538, %v540, %v536
    %v542 = vmul.f32 1.0, %v541
    %v543 = vrcp.pop %v527
    %v544 = vmul.f32 %v527, %v543
    %v545 = vsub.f32 1.0, %v544
    %v546 = vmul.f32 %v543, %v545
    %v547 = vadd.f32 %v543, %v546
    %vm548 = vweird.f32 %v527
    %vm549 = vweird.f32 %v543
    %vm550 = vmor %vm548, %vm549
    %v551 = vsel %vm550, %v543, %v547
    %v552 = vand.u32 2147483647, %v527
    %vm553 = vcmp.eq.f32.partialorder %v552, 8.507059e+37
    %v554 = vand.u32 %v527, 2147483648
    %v555 = vor.u32 1.1754944e-38, %v554
    %v556 = vsel %vm553, %v555, %v551
    %v557 = vmul.f32 1.0, %v556
    %v558 = vtanh.pop %v519
    %v559 = vmul.f32 %v542, %v468
    %561 = vrot.lane.b32.xlu0 %v558, 64
    %v562 = vpop.permute.xlu0 %561
    %v564 = vmul.f32 %v542, %v562
    %566 = vrot.lane.b32.xlu0 %v564, 64
    %v567 = vpop.permute.xlu0 %566
    %v569 = vadd.f32 %v559, %v567
    %v570 = vtanh.pop %v569
    %572 = vrot.lane.b32.xlu0 %v570, 64
    %v573 = vpop.permute.xlu0 %572
    %v575 = vmul.f32 %v557, %v573
    %v577 = vsel %vm272, %v575, 0
    %579 = vmatpush.msra.mxu0 0.0
    %580 = vmatpush.msra.mxu0 0.0
    %581 = vmatpush.msra.mxu0 0.0
    %582 = vmatpush.msra.mxu0 0.0
    %583 = vmatpush.msra.mxu0 0.0
    %584 = vmatpush.msra.mxu0 0.0
    %585 = vmatpush.msra.mxu0 0.0
    %586 = vmatpush.msra.mxu0 0.0
    %587 = vmatpush.msra.mxu0 %v270
    %588 = vmatpush.msra.mxu0 %v268
    %589 = vmatpush.msra.mxu0 %v266
    %590 = vmatpush.msra.mxu0 %v264
    %591 = vmatpush.msra.mxu0 %v262
    %592 = vmatpush.msra.mxu0 %v260
    %593 = vmatpush.msra.mxu0 %v258
    %594 = vmatpush.msra.mxu0 %v256
    %595 = vmatmul.f32.gmra.mxu0 %v577
    %v596 = vpop.f32.mrf.mxu0
    %v597 = vadd.f32 0.0, %v596
    %598 = vdwg.mxu0
    %599 = vmatpush.msra.mxu0 0.0
    %600 = vmatpush.msra.mxu0 0.0
    %601 = vmatpush.msra.mxu0 0.0
    %602 = vmatpush.msra.mxu0 0.0
    %603 = vmatpush.msra.mxu0 0.0
    %604 = vmatpush.msra.mxu0 0.0
    %605 = vmatpush.msra.mxu0 0.0
    %606 = vmatpush.msra.mxu0 0.0
    %607 = vmatpush.msra.mxu0 %v271
    %608 = vmatpush.msra.mxu0 %v269
    %609 = vmatpush.msra.mxu0 %v267
    %610 = vmatpush.msra.mxu0 %v265
    %611 = vmatpush.msra.mxu0 %v263
    %612 = vmatpush.msra.mxu0 %v261
    %613 = vmatpush.msra.mxu0 %v259
    %614 = vmatpush.msra.mxu0 %v257
    %615 = vmatmul.f32.gmra.mxu0 %v577
    %v616 = vpop.f32.mrf.mxu0
    %v617 = vadd.f32 0.0, %v616
    %618 = vdwg.mxu0
    %v619 = vadd.f32 %v201, %v597
    %v620 = vadd.f32 %v242, %v617
    %v621 = vxor.u32 %v619, 2147483648
    %v622 = vxor.u32 %v620, 2147483648
    %v623 = vmul.f32 %v621, 1.442695
    %v624 = vpow.pop %v623
    %v625 = vmul.f32 %v622, 1.442695
    %v626 = vpow.pop %v625
    %v627 = vadd.f32 %v624, 1.0
    %v628 = vadd.f32 %v626, 1.0
    %v629 = vrcp.pop %v627
    %v630 = vmul.f32 %v627, %v629
    %v631 = vsub.f32 1.0, %v630
    %v632 = vmul.f32 %v629, %v631
    %v633 = vadd.f32 %v629, %v632
    %vm634 = vweird.f32 %v627
    %vm635 = vweird.f32 %v629
    %vm636 = vmor %vm634, %vm635
    %v637 = vsel %vm636, %v629, %v633
    %v638 = vand.u32 2147483647, %v627
    %vm639 = vcmp.eq.f32.partialorder %v638, 8.507059e+37
    %v640 = vand.u32 %v627, 2147483648
    %v641 = vor.u32 1.1754944e-38, %v640
    %v642 = vsel %vm639, %v641, %v637
    %v643 = vmul.f32 1.0, %v642
    %v644 = vrcp.pop %v628
    %v645 = vmul.f32 %v628, %v644
    %v646 = vsub.f32 1.0, %v645
    %v647 = vmul.f32 %v644, %v646
    %v648 = vadd.f32 %v644, %v647
    %vm649 = vweird.f32 %v628
    %vm650 = vweird.f32 %v644
    %vm651 = vmor %vm649, %vm650
    %v652 = vsel %vm651, %v644, %v648
    %v653 = vand.u32 2147483647, %v628
    %vm654 = vcmp.eq.f32.partialorder %v653, 8.507059e+37
    %v655 = vand.u32 %v628, 2147483648
    %v656 = vor.u32 1.1754944e-38, %v655
    %v657 = vsel %vm654, %v656, %v652
    %v658 = vmul.f32 1.0, %v657
    %v659 = vtanh.pop %v620
    %v660 = vmul.f32 %v643, %v569
    %662 = vrot.lane.b32.xlu0 %v659, 64
    %v663 = vpop.permute.xlu0 %662
    %v665 = vmul.f32 %v643, %v663
    %667 = vrot.lane.b32.xlu0 %v665, 64
    %v668 = vpop.permute.xlu0 %667
    %v670 = vadd.f32 %v660, %v668
    %v671 = vtanh.pop %v670
    %673 = vrot.lane.b32.xlu0 %v671, 64
    %v674 = vpop.permute.xlu0 %673
    %v676 = vmul.f32 %v658, %v674
    %v678 = vsel %vm272, %v676, 0
    %680 = vmatpush.msra.mxu0 0.0
    %681 = vmatpush.msra.mxu0 0.0
    %682 = vmatpush.msra.mxu0 0.0
    %683 = vmatpush.msra.mxu0 0.0
    %684 = vmatpush.msra.mxu0 0.0
    %685 = vmatpush.msra.mxu0 0.0
    %686 = vmatpush.msra.mxu0 0.0
    %687 = vmatpush.msra.mxu0 0.0
    %688 = vmatpush.msra.mxu0 %v270
    %689 = vmatpush.msra.mxu0 %v268
    %690 = vmatpush.msra.mxu0 %v266
    %691 = vmatpush.msra.mxu0 %v264
    %692 = vmatpush.msra.mxu0 %v262
    %693 = vmatpush.msra.mxu0 %v260
    %694 = vmatpush.msra.mxu0 %v258
    %695 = vmatpush.msra.mxu0 %v256
    %696 = vmatmul.f32.gmra.mxu0 %v678
    %v697 = vpop.f32.mrf.mxu0
    %v698 = vadd.f32 0.0, %v697
    %699 = vdwg.mxu0
    %700 = vmatpush.msra.mxu0 0.0
    %701 = vmatpush.msra.mxu0 0.0
    %702 = vmatpush.msra.mxu0 0.0
    %703 = vmatpush.msra.mxu0 0.0
    %704 = vmatpush.msra.mxu0 0.0
    %705 = vmatpush.msra.mxu0 0.0
    %706 = vmatpush.msra.mxu0 0.0
    %707 = vmatpush.msra.mxu0 0.0
    %708 = vmatpush.msra.mxu0 %v271
    %709 = vmatpush.msra.mxu0 %v269
    %710 = vmatpush.msra.mxu0 %v267
    %711 = vmatpush.msra.mxu0 %v265
    %712 = vmatpush.msra.mxu0 %v263
    %713 = vmatpush.msra.mxu0 %v261
    %714 = vmatpush.msra.mxu0 %v259
    %715 = vmatpush.msra.mxu0 %v257
    %716 = vmatmul.f32.gmra.mxu0 %v678
    %v717 = vpop.f32.mrf.mxu0
    %v718 = vadd.f32 0.0, %v717
    %719 = vdwg.mxu0
    %v720 = vadd.f32 %v204, %v698
    %v721 = vadd.f32 %v245, %v718
    %v722 = vxor.u32 %v720, 2147483648
    %v723 = vxor.u32 %v721, 2147483648
    %v724 = vmul.f32 %v722, 1.442695
    %v725 = vpow.pop %v724
    %v726 = vmul.f32 %v723, 1.442695
    %v727 = vpow.pop %v726
    %v728 = vadd.f32 %v725, 1.0
    %v729 = vadd.f32 %v727, 1.0
    %v730 = vrcp.pop %v728
    %v731 = vmul.f32 %v728, %v730
    %v732 = vsub.f32 1.0, %v731
    %v733 = vmul.f32 %v730, %v732
    %v734 = vadd.f32 %v730, %v733
    %vm735 = vweird.f32 %v728
    %vm736 = vweird.f32 %v730
    %vm737 = vmor %vm735, %vm736
    %v738 = vsel %vm737, %v730, %v734
    %v739 = vand.u32 2147483647, %v728
    %vm740 = vcmp.eq.f32.partialorder %v739, 8.507059e+37
    %v741 = vand.u32 %v728, 2147483648
    %v742 = vor.u32 1.1754944e-38, %v741
    %v743 = vsel %vm740, %v742, %v738
    %v744 = vmul.f32 1.0, %v743
    %v745 = vrcp.pop %v729
    %v746 = vmul.f32 %v729, %v745
    %v747 = vsub.f32 1.0, %v746
    %v748 = vmul.f32 %v745, %v747
    %v749 = vadd.f32 %v745, %v748
    %vm750 = vweird.f32 %v729
    %vm751 = vweird.f32 %v745
    %vm752 = vmor %vm750, %vm751
    %v753 = vsel %vm752, %v745, %v749
    %v754 = vand.u32 2147483647, %v729
    %vm755 = vcmp.eq.f32.partialorder %v754, 8.507059e+37
    %v756 = vand.u32 %v729, 2147483648
    %v757 = vor.u32 1.1754944e-38, %v756
    %v758 = vsel %vm755, %v757, %v753
    %v759 = vmul.f32 1.0, %v758
    %v760 = vtanh.pop %v721
    %v761 = vmul.f32 %v744, %v670
    %763 = vrot.lane.b32.xlu0 %v760, 64
    %v764 = vpop.permute.xlu0 %763
    %v766 = vmul.f32 %v744, %v764
    %768 = vrot.lane.b32.xlu0 %v766, 64
    %v769 = vpop.permute.xlu0 %768
    %v771 = vadd.f32 %v761, %v769
    %v772 = vtanh.pop %v771
    %774 = vrot.lane.b32.xlu0 %v772, 64
    %v775 = vpop.permute.xlu0 %774
    %v777 = vmul.f32 %v759, %v775
    %v779 = vsel %vm272, %v777, 0
    %781 = vmatpush.msra.mxu0 0.0
    %782 = vmatpush.msra.mxu0 0.0
    %783 = vmatpush.msra.mxu0 0.0
    %784 = vmatpush.msra.mxu0 0.0
    %785 = vmatpush.msra.mxu0 0.0
    %786 = vmatpush.msra.mxu0 0.0
    %787 = vmatpush.msra.mxu0 0.0
    %788 = vmatpush.msra.mxu0 0.0
    %789 = vmatpush.msra.mxu0 %v270
    %790 = vmatpush.msra.mxu0 %v268
    %791 = vmatpush.msra.mxu0 %v266
    %792 = vmatpush.msra.mxu0 %v264
    %793 = vmatpush.msra.mxu0 %v262
    %794 = vmatpush.msra.mxu0 %v260
    %795 = vmatpush.msra.mxu0 %v258
    %796 = vmatpush.msra.mxu0 %v256
    %797 = vmatmul.f32.gmra.mxu0 %v779
    %v798 = vpop.f32.mrf.mxu0
    %v799 = vadd.f32 0.0, %v798
    %800 = vdwg.mxu0
    %801 = vmatpush.msra.mxu0 0.0
    %802 = vmatpush.msra.mxu0 0.0
    %803 = vmatpush.msra.mxu0 0.0
    %804 = vmatpush.msra.mxu0 0.0
    %805 = vmatpush.msra.mxu0 0.0
    %806 = vmatpush.msra.mxu0 0.0
    %807 = vmatpush.msra.mxu0 0.0
    %808 = vmatpush.msra.mxu0 0.0
    %809 = vmatpush.msra.mxu0 %v271
    %810 = vmatpush.msra.mxu0 %v269
    %811 = vmatpush.msra.mxu0 %v267
    %812 = vmatpush.msra.mxu0 %v265
    %813 = vmatpush.msra.mxu0 %v263
    %814 = vmatpush.msra.mxu0 %v261
    %815 = vmatpush.msra.mxu0 %v259
    %816 = vmatpush.msra.mxu0 %v257
    %817 = vmatmul.f32.gmra.mxu0 %v779
    %v818 = vpop.f32.mrf.mxu0
    %v819 = vadd.f32 0.0, %v818
    %820 = vdwg.mxu0
    %v821 = vadd.f32 %v207, %v799
    %v822 = vadd.f32 %v248, %v819
    %v823 = vxor.u32 %v821, 2147483648
    %v824 = vxor.u32 %v822, 2147483648
    %v825 = vmul.f32 %v823, 1.442695
    %v826 = vpow.pop %v825
    %v827 = vmul.f32 %v824, 1.442695
    %v828 = vpow.pop %v827
    %v829 = vadd.f32 %v826, 1.0
    %v830 = vadd.f32 %v828, 1.0
    %v831 = vrcp.pop %v829
    %v832 = vmul.f32 %v829, %v831
    %v833 = vsub.f32 1.0, %v832
    %v834 = vmul.f32 %v831, %v833
    %v835 = vadd.f32 %v831, %v834
    %vm836 = vweird.f32 %v829
    %vm837 = vweird.f32 %v831
    %vm838 = vmor %vm836, %vm837
    %v839 = vsel %vm838, %v831, %v835
    %v840 = vand.u32 2147483647, %v829
    %vm841 = vcmp.eq.f32.partialorder %v840, 8.507059e+37
    %v842 = vand.u32 %v829, 2147483648
    %v843 = vor.u32 1.1754944e-38, %v842
    %v844 = vsel %vm841, %v843, %v839
    %v845 = vmul.f32 1.0, %v844
    %v846 = vrcp.pop %v830
    %v847 = vmul.f32 %v830, %v846
    %v848 = vsub.f32 1.0, %v847
    %v849 = vmul.f32 %v846, %v848
    %v850 = vadd.f32 %v846, %v849
    %vm851 = vweird.f32 %v830
    %vm852 = vweird.f32 %v846
    %vm853 = vmor %vm851, %vm852
    %v854 = vsel %vm853, %v846, %v850
    %v855 = vand.u32 2147483647, %v830
    %vm856 = vcmp.eq.f32.partialorder %v855, 8.507059e+37
    %v857 = vand.u32 %v830, 2147483648
    %v858 = vor.u32 1.1754944e-38, %v857
    %v859 = vsel %vm856, %v858, %v854
    %v860 = vmul.f32 1.0, %v859
    %v861 = vtanh.pop %v822
    %v862 = vmul.f32 %v845, %v771
    %864 = vrot.lane.b32.xlu0 %v861, 64
    %v865 = vpop.permute.xlu0 %864
    %v867 = vmul.f32 %v845, %v865
    %869 = vrot.lane.b32.xlu0 %v867, 64
    %v870 = vpop.permute.xlu0 %869
    %v872 = vadd.f32 %v862, %v870
    %v873 = vtanh.pop %v872
    %875 = vrot.lane.b32.xlu0 %v873, 64
    %v876 = vpop.permute.xlu0 %875
    %v878 = vmul.f32 %v860, %v876
    %v880 = vsel %vm272, %v878, 0
    %882 = vmatpush.msra.mxu0 0.0
    %883 = vmatpush.msra.mxu0 0.0
    %884 = vmatpush.msra.mxu0 0.0
    %885 = vmatpush.msra.mxu0 0.0
    %886 = vmatpush.msra.mxu0 0.0
    %887 = vmatpush.msra.mxu0 0.0
    %888 = vmatpush.msra.mxu0 0.0
    %889 = vmatpush.msra.mxu0 0.0
    %890 = vmatpush.msra.mxu0 %v270
    %891 = vmatpush.msra.mxu0 %v268
    %892 = vmatpush.msra.mxu0 %v266
    %893 = vmatpush.msra.mxu0 %v264
    %894 = vmatpush.msra.mxu0 %v262
    %895 = vmatpush.msra.mxu0 %v260
    %896 = vmatpush.msra.mxu0 %v258
    %897 = vmatpush.msra.mxu0 %v256
    %898 = vmatmul.f32.gmra.mxu0 %v880
    %v899 = vpop.f32.mrf.mxu0
    %v900 = vadd.f32 0.0, %v899
    %901 = vdwg.mxu0
    %902 = vmatpush.msra.mxu0 0.0
    %903 = vmatpush.msra.mxu0 0.0
    %904 = vmatpush.msra.mxu0 0.0
    %905 = vmatpush.msra.mxu0 0.0
    %906 = vmatpush.msra.mxu0 0.0
    %907 = vmatpush.msra.mxu0 0.0
    %908 = vmatpush.msra.mxu0 0.0
    %909 = vmatpush.msra.mxu0 0.0
    %910 = vmatpush.msra.mxu0 %v271
    %911 = vmatpush.msra.mxu0 %v269
    %912 = vmatpush.msra.mxu0 %v267
    %913 = vmatpush.msra.mxu0 %v265
    %914 = vmatpush.msra.mxu0 %v263
    %915 = vmatpush.msra.mxu0 %v261
    %916 = vmatpush.msra.mxu0 %v259
    %917 = vmatpush.msra.mxu0 %v257
    %918 = vmatmul.f32.gmra.mxu0 %v880
    %v919 = vpop.f32.mrf.mxu0
    %v920 = vadd.f32 0.0, %v919
    %921 = vdwg.mxu0
    %v922 = vadd.f32 %v210, %v900
    %v923 = vadd.f32 %v251, %v920
    %v924 = vxor.u32 %v922, 2147483648
    %v925 = vxor.u32 %v923, 2147483648
    %v926 = vmul.f32 %v924, 1.442695
    %v927 = vpow.pop %v926
    %v928 = vmul.f32 %v925, 1.442695
    %v929 = vpow.pop %v928
    %v930 = vadd.f32 %v927, 1.0
    %v931 = vadd.f32 %v929, 1.0
    %v932 = vrcp.pop %v930
    %v933 = vmul.f32 %v930, %v932
    %v934 = vsub.f32 1.0, %v933
    %v935 = vmul.f32 %v932, %v934
    %v936 = vadd.f32 %v932, %v935
    %vm937 = vweird.f32 %v930
    %vm938 = vweird.f32 %v932
    %vm939 = vmor %vm937, %vm938
    %v940 = vsel %vm939, %v932, %v936
    %v941 = vand.u32 2147483647, %v930
    %vm942 = vcmp.eq.f32.partialorder %v941, 8.507059e+37
    %v943 = vand.u32 %v930, 2147483648
    %v944 = vor.u32 1.1754944e-38, %v943
    %v945 = vsel %vm942, %v944, %v940
    %v946 = vmul.f32 1.0, %v945
    %v947 = vrcp.pop %v931
    %v948 = vmul.f32 %v931, %v947
    %v949 = vsub.f32 1.0, %v948
    %v950 = vmul.f32 %v947, %v949
    %v951 = vadd.f32 %v947, %v950
    %vm952 = vweird.f32 %v931
    %vm953 = vweird.f32 %v947
    %vm954 = vmor %vm952, %vm953
    %v955 = vsel %vm954, %v947, %v951
    %v956 = vand.u32 2147483647, %v931
    %vm957 = vcmp.eq.f32.partialorder %v956, 8.507059e+37
    %v958 = vand.u32 %v931, 2147483648
    %v959 = vor.u32 1.1754944e-38, %v958
    %v960 = vsel %vm957, %v959, %v955
    %v961 = vmul.f32 1.0, %v960
    %v962 = vtanh.pop %v923
    %v963 = vmul.f32 %v946, %v872
    %965 = vrot.lane.b32.xlu0 %v962, 64
    %v966 = vpop.permute.xlu0 %965
    %v968 = vmul.f32 %v946, %v966
    %970 = vrot.lane.b32.xlu0 %v968, 64
    %v971 = vpop.permute.xlu0 %970
    %v973 = vadd.f32 %v963, %v971
    %v974 = vtanh.pop %v973
    %976 = vrot.lane.b32.xlu0 %v974, 64
    %v977 = vpop.permute.xlu0 %976
    %v979 = vmul.f32 %v961, %v977
    %v981 = vsel %vm272, %v979, 0
    %983 = vmatpush.msra.mxu0 0.0
    %984 = vmatpush.msra.mxu0 0.0
    %985 = vmatpush.msra.mxu0 0.0
    %986 = vmatpush.msra.mxu0 0.0
    %987 = vmatpush.msra.mxu0 0.0
    %988 = vmatpush.msra.mxu0 0.0
    %989 = vmatpush.msra.mxu0 0.0
    %990 = vmatpush.msra.mxu0 0.0
    %991 = vmatpush.msra.mxu0 %v270
    %992 = vmatpush.msra.mxu0 %v268
    %993 = vmatpush.msra.mxu0 %v266
    %994 = vmatpush.msra.mxu0 %v264
    %995 = vmatpush.msra.mxu0 %v262
    %996 = vmatpush.msra.mxu0 %v260
    %997 = vmatpush.msra.mxu0 %v258
    %998 = vmatpush.msra.mxu0 %v256
    %999 = vmatmul.f32.gmra.mxu0 %v981
    %v1000 = vpop.f32.mrf.mxu0
    %v1001 = vadd.f32 0.0, %v1000
    %1002 = vdwg.mxu0
    %1003 = vmatpush.msra.mxu0 0.0
    %1004 = vmatpush.msra.mxu0 0.0
    %1005 = vmatpush.msra.mxu0 0.0
    %1006 = vmatpush.msra.mxu0 0.0
    %1007 = vmatpush.msra.mxu0 0.0
    %1008 = vmatpush.msra.mxu0 0.0
    %1009 = vmatpush.msra.mxu0 0.0
    %1010 = vmatpush.msra.mxu0 0.0
    %1011 = vmatpush.msra.mxu0 %v271
    %1012 = vmatpush.msra.mxu0 %v269
    %1013 = vmatpush.msra.mxu0 %v267
    %1014 = vmatpush.msra.mxu0 %v265
    %1015 = vmatpush.msra.mxu0 %v263
    %1016 = vmatpush.msra.mxu0 %v261
    %1017 = vmatpush.msra.mxu0 %v259
    %1018 = vmatpush.msra.mxu0 %v257
    %1019 = vmatmul.f32.gmra.mxu0 %v981
    %v1020 = vpop.f32.mrf.mxu0
    %v1021 = vadd.f32 0.0, %v1020
    %1022 = vdwg.mxu0
    %v1023 = vadd.f32 %v213, %v1001
    %v1024 = vadd.f32 %v254, %v1021
    %v1025 = vxor.u32 %v1023, 2147483648
    %v1026 = vxor.u32 %v1024, 2147483648
    %v1027 = vmul.f32 %v1025, 1.442695
    %v1028 = vpow.pop %v1027
    %v1029 = vmul.f32 %v1026, 1.442695
    %v1030 = vpow.pop %v1029
    %v1031 = vadd.f32 %v1028, 1.0
    %v1032 = vadd.f32 %v1030, 1.0
    %v1033 = vrcp.pop %v1031
    %v1034 = vmul.f32 %v1031, %v1033
    %v1035 = vsub.f32 1.0, %v1034
    %v1036 = vmul.f32 %v1033, %v1035
    %v1037 = vadd.f32 %v1033, %v1036
    %vm1038 = vweird.f32 %v1031
    %vm1039 = vweird.f32 %v1033
    %vm1040 = vmor %vm1038, %vm1039
    %v1041 = vsel %vm1040, %v1033, %v1037
    %v1042 = vand.u32 2147483647, %v1031
    %vm1043 = vcmp.eq.f32.partialorder %v1042, 8.507059e+37
    %v1044 = vand.u32 %v1031, 2147483648
    %v1045 = vor.u32 1.1754944e-38, %v1044
    %v1046 = vsel %vm1043, %v1045, %v1041
    %v1047 = vmul.f32 1.0, %v1046
    %v1048 = vrcp.pop %v1032
    %v1049 = vmul.f32 %v1032, %v1048
    %v1050 = vsub.f32 1.0, %v1049
    %v1051 = vmul.f32 %v1048, %v1050
    %v1052 = vadd.f32 %v1048, %v1051
    %vm1053 = vweird.f32 %v1032
    %vm1054 = vweird.f32 %v1048
    %vm1055 = vmor %vm1053, %vm1054
    %v1056 = vsel %vm1055, %v1048, %v1052
    %v1057 = vand.u32 2147483647, %v1032
    %vm1058 = vcmp.eq.f32.partialorder %v1057, 8.507059e+37
    %v1059 = vand.u32 %v1032, 2147483648
    %v1060 = vor.u32 1.1754944e-38, %v1059
    %v1061 = vsel %vm1058, %v1060, %v1056
    %v1062 = vmul.f32 1.0, %v1061
    %v1063 = vtanh.pop %v1024
    %v1064 = vmul.f32 %v1047, %v973
    %1066 = vrot.lane.b32.xlu0 %v1063, 64
    %v1067 = vpop.permute.xlu0 %1066
    %v1069 = vmul.f32 %v1047, %v1067
    %1071 = vrot.lane.b32.xlu0 %v1069, 64
    %v1072 = vpop.permute.xlu0 %1071
    %v1074 = vadd.f32 %v1064, %v1072
    %v1075 = vtanh.pop %v1074
    %1077 = vrot.lane.b32.xlu0 %v1075, 64
    %v1078 = vpop.permute.xlu0 %1077
    %v1080 = vmul.f32 %v1062, %v1078
    %vm1081 = vcmask 517120
    %1082 = vst.msk [vmem:[#allocation5] sm:$0x3] %vm1081, %v1080
    // Predicated region
    $region22: #{tpu_custom_call.1} parent=1 // pred_check
      _
    $region23: #{tpu_custom_call.1} parent=1 // pred_check_branch
      %1084 = sbr.rel (0) target = $region25
    $region24: #{tpu_custom_call.1} parent=1 // pred_region
      %1086 = vsyncadd [#allocation4], 0
      %s1088 = sshll.u32 [#allocation5], 4
      %s1089 = int_to_ptr.vmem [resolvable:$true] %s1088
      %s1090 = sshll.u32 %s4, 4
      %s1091 = int_to_ptr.hbm [resolvable:$true] %s1090
      %1093 = dma.vmem_to_hbm [thread:$0]  %s1089, 32, %s1091, [#allocation4]
    $region25: #{tpu_custom_call.1} parent=1 // pred_fallthru
      _
    // Predicated region
    $region26: #{tpu_custom_call.1} parent=1 // pred_check
      _
    $region27: #{tpu_custom_call.1} parent=1 // pred_check_branch
      %1095 = sbr.rel (0) target = $region29
    $region28: #{tpu_custom_call.1} parent=1 // pred_region
      %1097 = dma.done [#allocation4], 32
    $region29: #{tpu_custom_call.1} parent=1 // pred_fallthru
      _
    %1098 = vsyncpa [#allocation3], 1
    %1099 = vsyncpa [#allocation4], 1

</llo_original>
